<compile_context>
chip_gen: v7x
topology: tpu7x:2x2x1
jax: 0.10.0
libtpu: 0.0.40
codegen_flags: <defaults>
</compile_context>

<pallas_src>
import functools

import jax
import jax.numpy as jnp
from jax.experimental import pallas as pl
from jax.experimental.pallas import tpu as pltpu


def _round_up(n, m):
    return ((n + m - 1) // m) * m


def _cdiv(a, b):
    return -(-a // b)


def _pick_batch_tile(B, block_b, min_tile=16):
    """Batch tile (multiple of min_tile sublanes) and padded batch size."""
    n_steps = max(1, _cdiv(B, block_b))
    # Prefer >= 2 grid steps so ("parallel",) can split the batch over the
    # two TensorCores on v7x; pointless for tiny batches (<= one tile).
    if n_steps == 1 and B > min_tile:
        n_steps = 2
    tb = _round_up(_cdiv(B, n_steps), min_tile)
    tb = min(tb, _round_up(B, min_tile))
    B_pad = _round_up(B, tb)
    return tb, B_pad


def _policy_kernel(x_ref, w1_ref, b1_ref, w2_ref, b2_ref, o_ref):
    # fc1: (tb, K) @ (K, H_pad) on the MXU (bf16 in, f32 accumulate) + ReLU.
    h = jnp.dot(x_ref[...], w1_ref[...], preferred_element_type=jnp.float32)
    h = jnp.maximum(h + b1_ref[...], 0.0)

    # fc2: (tb, H_pad) @ (H_pad, A_pad), bias add in f32.
    logits = jnp.dot(h.astype(w2_ref.dtype), w2_ref[...],
                     preferred_element_type=jnp.float32)
    # Padded action lanes carry bias = -1e30 (baked into b2p in the wrapper),
    # so exp underflows to 0 and they never affect the max / denominator.
    logits = logits + b2_ref[...]

    # Numerically stable softmax over the lane-dense last axis.
    m = jnp.max(logits, axis=-1, keepdims=True)
    e = jnp.exp(logits - m)
    denom = jnp.sum(e, axis=-1, keepdims=True)
    o_ref[...] = (e / denom).astype(o_ref.dtype)   # exact divide: rows sum to 1


def prepare_params(w1, b1, w2, b2):
    """One-time pad/cast of the weights (call once after init/update).

    w1: (state_dim, H); b1: (H,); w2: (H, A); b2: (A,).  Weights are stored
    (in_features, out_features), i.e. PyTorch's x @ W.T layout pre-transposed.
    """
    K, H = w1.shape
    A = w2.shape[1]
    H_pad = _round_up(H, 128)
    A_pad = _round_up(A, 128)

    w1p = jnp.pad(w1.astype(jnp.bfloat16), ((0, 0), (0, H_pad - H)))
    b1p = jnp.pad(b1.astype(jnp.float32).reshape(1, H), ((0, 0), (0, H_pad - H)))
    w2p = jnp.pad(w2.astype(jnp.bfloat16), ((0, H_pad - H), (0, A_pad - A)))
    # Bake the action-lane mask into the bias: padded lanes -> -1e30.
    b2p = jnp.pad(b2.astype(jnp.float32).reshape(1, A), ((0, 0), (0, A_pad - A)),
                  constant_values=-1e30)
    return w1p, b1p, w2p, b2p


@functools.partial(jax.jit, static_argnames=("action_dim", "block_b"))
def policy_forward(x, w1p, b1p, w2p, b2p, *, action_dim, block_b=2048):
    """x: (B, state_dim) f32; padded params from prepare_params(); -> (B, A) f32."""
    B, K = x.shape
    H_pad = w1p.shape[1]
    A_pad = w2p.shape[1]

    tb, B_pad = _pick_batch_tile(B, block_b)

    xb = x.astype(jnp.bfloat16)
    if B_pad != B:
        xb = jnp.pad(xb, ((0, B_pad - B), (0, 0)))

    grid = (B_pad // tb,)
    cost = pl.CostEstimate(
        flops=2 * B_pad * (K * H_pad + H_pad * A_pad),
        transcendentals=B_pad * A_pad,
        bytes_accessed=(xb.size * 2 + (w1p.size + w2p.size) * 2
                        + (b1p.size + b2p.size) * 4 + B_pad * A_pad * 2),
    )

    out = pl.pallas_call(
        _policy_kernel,
        out_shape=jax.ShapeDtypeStruct((B_pad, A_pad), jnp.bfloat16),
        grid_spec=pltpu.PrefetchScalarGridSpec(
            num_scalar_prefetch=0,
            grid=grid,
            in_specs=[
                pl.BlockSpec((tb, K), lambda i: (i, 0)),         # x tile (K unpadded)
                pl.BlockSpec((K, H_pad), lambda i: (0, 0)),      # w1 (VMEM-resident)
                pl.BlockSpec((1, H_pad), lambda i: (0, 0)),      # b1 (resident)
                pl.BlockSpec((H_pad, A_pad), lambda i: (0, 0)),  # w2 (resident)
                pl.BlockSpec((1, A_pad), lambda i: (0, 0)),      # b2 (resident, mask baked in)
            ],
            out_specs=pl.BlockSpec((tb, A_pad), lambda i: (i, 0)),
        ),
        compiler_params=pltpu.CompilerParams(
            dimension_semantics=("parallel",)),   # v7x: batch axis over 2 TCs
        cost_estimate=cost,
    )(xb, w1p, b1p, w2p, b2p)

    # TODO(synk): callers that can consume the padded (B_pad, A_pad) bf16 slab
    # directly (e.g. argmax/sample over the first A lanes) can skip this slice.
    return out[:B, :action_dim].astype(jnp.float32)


def init_params(key, state_dim, action_dim, hidden_dim=128):
    # Mimics nn.Linear's uniform(-1/sqrt(in), 1/sqrt(in)) init, deterministic.
    k1, k2, k3, k4 = jax.random.split(key, 4)
    lim1 = 1.0 / jnp.sqrt(state_dim)
    lim2 = 1.0 / jnp.sqrt(hidden_dim)
    w1 = jax.random.uniform(k1, (state_dim, hidden_dim), jnp.float32, -lim1, lim1)
    b1 = jax.random.uniform(k2, (hidden_dim,), jnp.float32, -lim1, lim1)
    w2 = jax.random.uniform(k3, (hidden_dim, action_dim), jnp.float32, -lim2, lim2)
    b2 = jax.random.uniform(k4, (action_dim,), jnp.float32, -lim2, lim2)
    return w1, b1, w2, b2


if __name__ == "__main__":
    key = jax.random.PRNGKey(0)
    kx, kp = jax.random.split(key)

    batch, state_dim, action_dim, hidden_dim = 4, 16, 8, 32
    x = jax.random.normal(kx, (batch, state_dim), jnp.float32)
    w1, b1, w2, b2 = init_params(kp, state_dim, action_dim, hidden_dim)

    params = prepare_params(w1, b1, w2, b2)   # one-time weight pad/cast
    out = policy_forward(x, *params, action_dim=action_dim)
    out = jax.block_until_ready(out)

    # Reference (f32). Kernel runs bf16 MXU with f32 accumulation + bf16 store,
    # so allow a modest tolerance.
    ref = jax.nn.softmax(jnp.maximum(x @ w1 + b1, 0.0) @ w2 + b2, axis=-1)
    assert out.shape == (batch, action_dim)
    assert jnp.allclose(out, ref, atol=2e-2, rtol=2e-2)
    assert jnp.allclose(jnp.sum(out, axis=-1), 1.0, atol=1e-2)

    # Exercise the multi-step grid + batch-padding path (2 grid steps on v7x).
    xb = jax.random.normal(kx, (300, state_dim), jnp.float32)
    outb = jax.block_until_ready(policy_forward(xb, *params, action_dim=action_dim))
    refb = jax.nn.softmax(jnp.maximum(xb @ w1 + b1, 0.0) @ w2 + b2, axis=-1)
    assert outb.shape == (300, action_dim)
    assert jnp.allclose(outb, refb, atol=2e-2, rtol=2e-2)

    print("KERNEL_OK")
</pallas_src>

<mosaic_0001>
module attributes {stable_mosaic.version = 11 : i64} {
  func.func @_policy_kernel(%arg0: i32, %arg1: memref<16x16xbf16, #tpu.memory_space<vmem>>, %arg2: memref<16x128xbf16, #tpu.memory_space<vmem>>, %arg3: memref<1x128xf32, #tpu.memory_space<vmem>>, %arg4: memref<128x128xbf16, #tpu.memory_space<vmem>>, %arg5: memref<1x128xf32, #tpu.memory_space<vmem>>, %arg6: memref<16x128xbf16, #tpu.memory_space<vmem>>) attributes {dimension_semantics = [#tpu.dimension_semantics<parallel>], iteration_bounds = array<i64: 1>, scalar_prefetch = 0 : i64, scratch_operands = 0 : i64, tpu.core_type = #tpu.core_type<tc>, window_params = [{transform_indices = @transform_0, window_bounds = array<i64: 16, 16>}, {pipeline_mode = #tpu.pipeline_mode<synchronous>, transform_indices = @transform_1, window_bounds = array<i64: 16, 128>}, {pipeline_mode = #tpu.pipeline_mode<synchronous>, transform_indices = @transform_2, window_bounds = array<i64: 1, 128>}, {pipeline_mode = #tpu.pipeline_mode<synchronous>, transform_indices = @transform_3, window_bounds = array<i64: 128, 128>}, {pipeline_mode = #tpu.pipeline_mode<synchronous>, transform_indices = @transform_4, window_bounds = array<i64: 1, 128>}, {transform_indices = @transform_5, window_bounds = array<i64: 16, 128>}]} {
    %c0 = arith.constant 0 : index
    %c0_0 = arith.constant 0 : index
    %0 = vector.load %arg1[%c0, %c0_0] : memref<16x16xbf16, #tpu.memory_space<vmem>>, vector<16x16xbf16>
    %c0_1 = arith.constant 0 : index
    %c0_2 = arith.constant 0 : index
    %1 = vector.load %arg2[%c0_1, %c0_2] : memref<16x128xbf16, #tpu.memory_space<vmem>>, vector<16x128xbf16>
    %cst = arith.constant dense<0.000000e+00> : vector<16x128xf32>
    %2 = tpu.matmul %0, %1, %cst {dimension_numbers = #tpu.dot_dimension_numbers<[1], [0], [0], [1], [0, 0, 1, 1], [], []>} : vector<16x16xbf16>, vector<16x128xbf16>, vector<16x128xf32> -> vector<16x128xf32>
    %c0_3 = arith.constant 0 : index
    %c0_4 = arith.constant 0 : index
    %3 = vector.load %arg3[%c0_3, %c0_4] : memref<1x128xf32, #tpu.memory_space<vmem>>, vector<1x128xf32>
    %4 = vector.broadcast %3 : vector<1x128xf32> to vector<16x128xf32>
    %5 = arith.addf %2, %4 : vector<16x128xf32>
    %cst_5 = arith.constant 0.000000e+00 : f32
    %6 = vector.broadcast %cst_5 : f32 to vector<16x128xf32>
    %7 = arith.maximumf %5, %6 : vector<16x128xf32>
    %8 = arith.truncf %7 : vector<16x128xf32> to vector<16x128xbf16>
    %c0_6 = arith.constant 0 : index
    %c0_7 = arith.constant 0 : index
    %9 = vector.load %arg4[%c0_6, %c0_7] : memref<128x128xbf16, #tpu.memory_space<vmem>>, vector<128x128xbf16>
    %cst_8 = arith.constant dense<0.000000e+00> : vector<16x128xf32>
    %10 = tpu.matmul %8, %9, %cst_8 {dimension_numbers = #tpu.dot_dimension_numbers<[1], [0], [0], [1], [0, 0, 1, 1], [], []>} : vector<16x128xbf16>, vector<128x128xbf16>, vector<16x128xf32> -> vector<16x128xf32>
    %c0_9 = arith.constant 0 : index
    %c0_10 = arith.constant 0 : index
    %11 = vector.load %arg5[%c0_9, %c0_10] : memref<1x128xf32, #tpu.memory_space<vmem>>, vector<1x128xf32>
    %12 = vector.broadcast %11 : vector<1x128xf32> to vector<16x128xf32>
    %13 = arith.addf %10, %12 : vector<16x128xf32>
    %cst_11 = arith.constant dense<0xFF800000> : vector<16xf32>
    %14 = vector.multi_reduction <maximumf>, %13, %cst_11 [1] : vector<16x128xf32> to vector<16xf32>
    %15 = vector.shape_cast %14 : vector<16xf32> to vector<16x1xf32>
    %16 = vector.broadcast %15 : vector<16x1xf32> to vector<16x128xf32>
    %17 = arith.subf %13, %16 : vector<16x128xf32>
    %18 = math.exp %17 : vector<16x128xf32>
    %cst_12 = arith.constant dense<0.000000e+00> : vector<16xf32>
    %19 = vector.multi_reduction <add>, %18, %cst_12 [1] : vector<16x128xf32> to vector<16xf32>
    %20 = vector.shape_cast %19 : vector<16xf32> to vector<16x1xf32>
    %21 = vector.broadcast %20 : vector<16x1xf32> to vector<16x128xf32>
    %22 = arith.divf %18, %21 : vector<16x128xf32>
    %23 = arith.truncf %22 : vector<16x128xf32> to vector<16x128xbf16>
    %c0_13 = arith.constant 0 : index
    %c0_14 = arith.constant 0 : index
    %24 = vector.load %arg6[%c0_13, %c0_14] : memref<16x128xbf16, #tpu.memory_space<vmem>>, vector<16x128xbf16>
    tpu.vector_store %arg6[%c0_13, %c0_14], %23 {strides = array<i32>} : memref<16x128xbf16, #tpu.memory_space<vmem>>, vector<16x128xbf16>,
    return
  }
  func.func @transform_0(%arg0: i32) -> (i32, i32) {
    %c0_i32 = arith.constant 0 : i32
    %c0_i32_0 = arith.constant 0 : i32
    return %arg0, %c0_i32 : i32, i32
  }
  func.func @transform_1(%arg0: i32) -> (i32, i32) {
    %c0_i32 = arith.constant 0 : i32
    %c0_i32_0 = arith.constant 0 : i32
    %c0_i32_1 = arith.constant 0 : i32
    return %c0_i32, %c0_i32_0 : i32, i32
  }
  func.func @transform_2(%arg0: i32) -> (i32, i32) {
    %c0_i32 = arith.constant 0 : i32
    %c0_i32_0 = arith.constant 0 : i32
    %c0_i32_1 = arith.constant 0 : i32
    return %c0_i32, %c0_i32_0 : i32, i32
  }
  func.func @transform_3(%arg0: i32) -> (i32, i32) {
    %c0_i32 = arith.constant 0 : i32
    %c0_i32_0 = arith.constant 0 : i32
    %c0_i32_1 = arith.constant 0 : i32
    return %c0_i32, %c0_i32_0 : i32, i32
  }
  func.func @transform_4(%arg0: i32) -> (i32, i32) {
    %c0_i32 = arith.constant 0 : i32
    %c0_i32_0 = arith.constant 0 : i32
    %c0_i32_1 = arith.constant 0 : i32
    return %c0_i32, %c0_i32_0 : i32, i32
  }
  func.func @transform_5(%arg0: i32) -> (i32, i32) {
    %c0_i32 = arith.constant 0 : i32
    %c0_i32_0 = arith.constant 0 : i32
    return %arg0, %c0_i32 : i32, i32
  }
}

</mosaic_0001>

<llo_original>
// kernel: policy_forward.1
$region0: #{policy_forward.1}
  #allocation0 [shape = 'u32[]', space=smem, size = 0x4, offset = 0x4, fixed_abs, tag = 'smem constant byte address 0x4 - core index']
  #allocation1 [shape = 'u32[144,128]{1,0:T(1,128)}', space=vmem, size = 0x12000, scoped, tag = 'internal scratch']
  %s0 = inlined_call_operand.vmem [shape: bf16[16,16], index: 0, kind: input, shape index: {}]
  %s1 = inlined_call_operand.vmem [shape: bf16[16,128], index: 1, kind: input, shape index: {}]
  %s2 = inlined_call_operand.vmem [shape: f32[1,128], index: 2, kind: input, shape index: {}]
  %s3 = inlined_call_operand.hbm [shape: bf16[128,128], index: 3, kind: input, shape index: {}]
  %s4 = inlined_call_operand.vmem [shape: f32[1,128], index: 4, kind: input, shape index: {}]
  %s5 = inlined_call_operand.vmem [shape: bf16[16,128], index: 5, kind: output, shape index: {}]
  %s6 = sld [smem:[#allocation0]]
  $region34: #{policy_forward.1} parent=0
    _
  %s8 = ssub.s32 1, %s6
  %s9 = scalar_select 0, %s8, %s6
  $region1: #{policy_forward.1} parent=0
    #allocation2 [shape = 'u8[32768]{0}', space=vmem, size = 0x8000, scoped, tag = 'input window, operand 3, single buffered']
    #allocation3 [shape = 's32[1]{0}', space=sflag, size = 0x4, scoped, tag = 'scoped memory for policy_forward.1']
    %10 = vsyncpa [#allocation3], 0
    // Predicated region
    $region2: #{policy_forward.1} parent=1 // pred_check
      _
    $region3: #{policy_forward.1} parent=1 // pred_check_branch
      %12 = sbr.rel (0) target = $region5
    $region4: #{policy_forward.1} parent=1 // pred_region
      _
    $region5: #{policy_forward.1} parent=1 // pred_fallthru
      _
    // Predicated region
    $region6: #{policy_forward.1} parent=1 // pred_check
      _
    $region7: #{policy_forward.1} parent=1 // pred_check_branch
      %14 = sbr.rel (0) target = $region9
    $region8: #{policy_forward.1} parent=1 // pred_region
      _
    $region9: #{policy_forward.1} parent=1 // pred_fallthru
      _
    // Predicated region
    $region10: #{policy_forward.1} parent=1 // pred_check
      _
    $region11: #{policy_forward.1} parent=1 // pred_check_branch
      %16 = sbr.rel (0) target = $region13
    $region12: #{policy_forward.1} parent=1 // pred_region
      _
    $region13: #{policy_forward.1} parent=1 // pred_fallthru
      _
    // Predicated region
    $region14: #{policy_forward.1} parent=1 // pred_check
      _
    $region15: #{policy_forward.1} parent=1 // pred_check_branch
      %18 = sbr.rel (0) target = $region17
    $region16: #{policy_forward.1} parent=1 // pred_region
      %s20 = ssub.s32 1024, 1024
      %21 = vsyncadd [#allocation3], %s20
      %s22 = sshll.u32 [#allocation2], 4
      %s23 = int_to_ptr.vmem [resolvable:$true] %s22
      %28 = dma.hbm_to_vmem [thread:$0]  %s3, 1024, %s23, [#allocation3], 64, 64, 4
    $region17: #{policy_forward.1} parent=1 // pred_fallthru
      _
    // Predicated region
    $region18: #{policy_forward.1} parent=1 // pred_check
      _
    $region19: #{policy_forward.1} parent=1 // pred_check_branch
      %30 = sbr.rel (0) target = $region21
    $region20: #{policy_forward.1} parent=1 // pred_region
      _
    $region21: #{policy_forward.1} parent=1 // pred_fallthru
      _
    // Predicated region
    $region22: #{policy_forward.1} parent=1 // pred_check
      _
    $region23: #{policy_forward.1} parent=1 // pred_check_branch
      %32 = sbr.rel (0) target = $region25
    $region24: #{policy_forward.1} parent=1 // pred_region
      %33 = dma.done [#allocation3], 1024
    $region25: #{policy_forward.1} parent=1 // pred_fallthru
      _
    %v35 = vld [vmem:[%s0] sm:$0xf]
    %v36 = vld [vmem:[%s0 + $0x4] sm:$0xf]
    %v37 = vld [vmem:[%s1] sm:$0xf]
    %v38 = vld [vmem:[%s1 + $0x4] sm:$0xf]
    %v39 = vld [vmem:[%s2] sm:$0x1]
    %v41 = vlaneseq
    %v42 = vshrl.u32 %v41, 7
    %v43 = vsub.s32 0, %v42
    %v44 = vrot.slane %v39, %v43
    %v48 = vunpack.c.l.b16 %v35
    %v49 = vunpack.c.l.b16 %v36
    %v50 = vpack.c.b16 %v49, %v48
    %v53 = vunpack.c.l.b16 %v37
    %v54 = vunpack.c.l.b16 %v38
    %v55 = vpack.c.b16 %v54, %v53
    %vm57 = vcmask 130048
    %v59 = vsel %vm57, %v50, 0
    %61 = vmatprep.subr.bf16.mxu0 0
    %62 = vmatpush1.bf16.msra.mxu0 %v55
    %63 = vmatprep.subr.bf16.mxu0 0
    %64 = vmatpush1.bf16.msra.mxu0 0
    %65 = vmatprep.subr.bf16.mxu0 0
    %66 = vmatpush1.bf16.msra.mxu0 0
    %67 = vmatprep.subr.bf16.mxu0 0
    %68 = vmatpush1.bf16.msra.mxu0 0
    %69 = vmatprep.subr.bf16.mxu0 0
    %70 = vmatpush1.bf16.msra.mxu0 0
    %71 = vmatprep.subr.bf16.mxu0 0
    %72 = vmatpush1.bf16.msra.mxu0 0
    %73 = vmatprep.subr.bf16.mxu0 0
    %74 = vmatpush1.bf16.msra.mxu0 0
    %75 = vmatprep.subr.bf16.mxu0 0
    %76 = vmatpush1.bf16.msra.mxu0 0
    %77 = vmatprep.subr.bf16.mxu0 0
    %78 = vmatpush1.bf16.msra.mxu0 0
    %79 = vmatprep.subr.bf16.mxu0 0
    %80 = vmatpush1.bf16.msra.mxu0 0
    %81 = vmatprep.subr.bf16.mxu0 0
    %82 = vmatpush1.bf16.msra.mxu0 0
    %83 = vmatprep.subr.bf16.mxu0 0
    %84 = vmatpush1.bf16.msra.mxu0 0
    %85 = vmatprep.subr.bf16.mxu0 0
    %86 = vmatpush1.bf16.msra.mxu0 0
    %87 = vmatprep.subr.bf16.mxu0 0
    %88 = vmatpush1.bf16.msra.mxu0 0
    %89 = vmatprep.subr.bf16.mxu0 0
    %90 = vmatpush1.bf16.msra.mxu0 0
    %91 = vmatprep.subr.bf16.mxu0 0
    %92 = vmatpush1.bf16.msra.mxu0 0
    %93 = vmatprep.mubr.bf16.mxu0 0
    %94 = vmatmul.mubr.bf16.gmra.mrb[0].mxu0 %v59
    %v95 = vpop.f32.mrb[0].mxu0
    %v96 = vadd.f32 %v44, %v95
    %v97 = vpop.f32.mrb[0].mxu0
    %v98 = vpop.f32.mrb[0].mxu0
    %v99 = vadd.f32 %v44, %v98
    %v100 = vpop.f32.mrb[0].mxu0
    %101 = vdwg.mxu0
    %v102 = vmax.f32 %v96, 0.0
    %v103 = vmax.f32 %v99, 0.0
    %v104 = vpack.c.bf16 %v103, %v102
    %v105 = vld [vmem:[#allocation2] sm:$0xf]
    %v106 = vld [vmem:[#allocation2 + $0x4] sm:$0xf]
    %v107 = vld [vmem:[#allocation2 + $0x8] sm:$0xf]
    %v108 = vld [vmem:[#allocation2 + $0xc] sm:$0xf]
    %v109 = vld [vmem:[#allocation2 + $0x10] sm:$0xf]
    %v110 = vld [vmem:[#allocation2 + $0x14] sm:$0xf]
    %v111 = vld [vmem:[#allocation2 + $0x18] sm:$0xf]
    %v112 = vld [vmem:[#allocation2 + $0x1c] sm:$0xf]
    %v113 = vld [vmem:[#allocation2 + $0x20] sm:$0xf]
    %v114 = vld [vmem:[#allocation2 + $0x24] sm:$0xf]
    %v115 = vld [vmem:[#allocation2 + $0x28] sm:$0xf]
    %v116 = vld [vmem:[#allocation2 + $0x2c] sm:$0xf]
    %v117 = vld [vmem:[#allocation2 + $0x30] sm:$0xf]
    %v118 = vld [vmem:[#allocation2 + $0x34] sm:$0xf]
    %v119 = vld [vmem:[#allocation2 + $0x38] sm:$0xf]
    %v120 = vld [vmem:[#allocation2 + $0x3c] sm:$0xf]
    %v121 = vld [vmem:[%s4] sm:$0x1]
    %v123 = vlaneseq
    %v124 = vshrl.u32 %v123, 7
    %v125 = vsub.s32 0, %v124
    %v126 = vrot.slane %v121, %v125
    %v144 = vunpack.c.l.b16 %v105
    %v145 = vunpack.c.l.b16 %v106
    %v146 = vunpack.c.l.b16 %v107
    %v147 = vunpack.c.l.b16 %v108
    %v148 = vunpack.c.l.b16 %v109
    %v149 = vunpack.c.l.b16 %v110
    %v150 = vunpack.c.l.b16 %v111
    %v151 = vunpack.c.l.b16 %v112
    %v152 = vunpack.c.l.b16 %v113
    %v153 = vunpack.c.l.b16 %v114
    %v154 = vunpack.c.l.b16 %v115
    %v155 = vunpack.c.l.b16 %v116
    %v156 = vunpack.c.l.b16 %v117
    %v157 = vunpack.c.l.b16 %v118
    %v158 = vunpack.c.l.b16 %v119
    %v159 = vunpack.c.l.b16 %v120
    %v160 = vpack.c.b16 %v145, %v144
    %v161 = vpack.c.b16 %v147, %v146
    %v162 = vpack.c.b16 %v149, %v148
    %v163 = vpack.c.b16 %v151, %v150
    %v164 = vpack.c.b16 %v153, %v152
    %v165 = vpack.c.b16 %v155, %v154
    %v166 = vpack.c.b16 %v157, %v156
    %v167 = vpack.c.b16 %v159, %v158
    %176 = vmatprep.subr.bf16.mxu0 0
    %177 = vmatpush1.bf16.msra.mxu0 %v160
    %178 = vmatprep.subr.bf16.mxu0 0
    %179 = vmatpush1.bf16.msra.mxu0 %v161
    %180 = vmatprep.subr.bf16.mxu0 0
    %181 = vmatpush1.bf16.msra.mxu0 %v162
    %182 = vmatprep.subr.bf16.mxu0 0
    %183 = vmatpush1.bf16.msra.mxu0 %v163
    %184 = vmatprep.subr.bf16.mxu0 0
    %185 = vmatpush1.bf16.msra.mxu0 %v164
    %186 = vmatprep.subr.bf16.mxu0 0
    %187 = vmatpush1.bf16.msra.mxu0 %v165
    %188 = vmatprep.subr.bf16.mxu0 0
    %189 = vmatpush1.bf16.msra.mxu0 %v166
    %190 = vmatprep.subr.bf16.mxu0 0
    %191 = vmatpush1.bf16.msra.mxu0 %v167
    %192 = vmatprep.subr.bf16.mxu0 0
    %193 = vmatpush1.bf16.msra.mxu0 0
    %194 = vmatprep.subr.bf16.mxu0 0
    %195 = vmatpush1.bf16.msra.mxu0 0
    %196 = vmatprep.subr.bf16.mxu0 0
    %197 = vmatpush1.bf16.msra.mxu0 0
    %198 = vmatprep.subr.bf16.mxu0 0
    %199 = vmatpush1.bf16.msra.mxu0 0
    %200 = vmatprep.subr.bf16.mxu0 0
    %201 = vmatpush1.bf16.msra.mxu0 0
    %202 = vmatprep.subr.bf16.mxu0 0
    %203 = vmatpush1.bf16.msra.mxu0 0
    %204 = vmatprep.subr.bf16.mxu0 0
    %205 = vmatpush1.bf16.msra.mxu0 0
    %206 = vmatprep.subr.bf16.mxu0 0
    %207 = vmatpush1.bf16.msra.mxu0 0
    %208 = vmatprep.mubr.bf16.mxu0 0
    %209 = vmatmul.mubr.bf16.gmra.mrb[0].mxu0 %v104
    %v210 = vpop.f32.mrb[0].mxu0
    %v211 = vadd.f32 %v126, %v210
    %v212 = vpop.f32.mrb[0].mxu0
    %v213 = vpop.f32.mrb[0].mxu0
    %v214 = vadd.f32 %v126, %v213
    %v215 = vpop.f32.mrb[0].mxu0
    %216 = vdwg.mxu0
    %217 = vmax.xlane.f32.xlu0 %v211
    %v218 = vpop.xlane.xlu0 %217
    %219 = vmax.xlane.f32.xlu0 %v214
    %v220 = vpop.xlane.xlu0 %219
    %v221 = vsub.f32 %v211, %v218
    %v222 = vsub.f32 %v214, %v220
    %v223 = vmul.f32 %v221, 1.442695
    %v224 = vpow.pop %v223
    %v225 = vmul.f32 %v222, 1.442695
    %v226 = vpow.pop %v225
    %227 = vadd.xlane.f32.xlu0 %v224
    %v228 = vpop.xlane.xlu0 %227
    %229 = vadd.xlane.f32.xlu0 %v226
    %v230 = vpop.xlane.xlu0 %229
    %v231 = vrcp.pop %v228
    %v232 = vmul.f32 %v224, %v231
    %v233 = vrcp.pop %v230
    %v234 = vmul.f32 %v226, %v233
    %v235 = vpack.c.bf16 %v234, %v232
    %v237 = vunpack.c.l.b16 %v235
    %v238 = vunpack.c.h.b16 %v235
    %v239 = vpack.c.b16 %v237, %v237
    %v240 = vpack.c.b16 %v238, %v238
    %243 = vst [vmem:[%s5] sm:$0xf] %v239
    %244 = vst [vmem:[%s5 + $0x4] sm:$0xf] %v240
    // Predicated region
    $region26: #{policy_forward.1} parent=1 // pred_check
      _
    $region27: #{policy_forward.1} parent=1 // pred_check_branch
      %246 = sbr.rel (0) target = $region29
    $region28: #{policy_forward.1} parent=1 // pred_region
      _
    $region29: #{policy_forward.1} parent=1 // pred_fallthru
      _
    // Predicated region
    $region30: #{policy_forward.1} parent=1 // pred_check
      _
    $region31: #{policy_forward.1} parent=1 // pred_check_branch
      %248 = sbr.rel (0) target = $region33
    $region32: #{policy_forward.1} parent=1 // pred_region
      _
    $region33: #{policy_forward.1} parent=1 // pred_fallthru
      _
    %249 = vsyncpa [#allocation3], 1

</llo_original>
